<compile_context>
chip_gen: v7x
topology: tpu7x:2x2x1
jax: 0.10.0
libtpu: 0.0.40
codegen_flags: <defaults>
</compile_context>

<pallas_src>
import jax
import jax.numpy as jnp
from jax.experimental import pallas as pl
from jax.experimental.pallas import tpu as pltpu


def _round_up(x, m):
    return ((x + m - 1) // m) * m


def _critic_kernel(obs_ref, w1_ref, b1_ref, w2_ref, b2_ref, w3_ref, b3_ref, out_ref):
    x = obs_ref[...]                                                      # (TB, obs_dim)
    h1 = jnp.dot(x, w1_ref[...], preferred_element_type=jnp.float32) + b1_ref[...]
    h1 = jnp.maximum(h1, 0.0)                                             # ReLU
    h2 = jnp.dot(h1, w2_ref[...], preferred_element_type=jnp.float32) + b2_ref[...]
    h2 = jnp.maximum(h2, 0.0)                                             # ReLU
    # Final Linear(H, 1): VPU multiply + lane reduction instead of an N=1 MXU matmul.
    # w3 is a (1, H) row, b3 is (1, 1); result is the (TB, 1) value column.
    v = jnp.sum(h2 * w3_ref[...], axis=-1, keepdims=True) + b3_ref[...]   # (TB, 1)
    out_ref[...] = v.astype(out_ref.dtype)


def critic_forward(obs, params, tile_b=1024):
    """obs: (B, obs_dim) float32. Returns (B,) float32 (squeezed last dim)."""
    w1, b1, w2, b2, w3, b3 = params
    B, obs_dim = obs.shape

    # Batch tile: big by default, clamped for small batches (sublane granularity = 8).
    tb = min(tile_b, _round_up(B, 8))
    num_tiles = pl.cdiv(B, tb)
    b_pad = num_tiles * tb
    if b_pad != B:
        obs = jnp.pad(obs, ((0, b_pad - B), (0, 0)))

    # Weights/biases: same block every grid step -> loaded once, VMEM-resident.
    const = lambda i: (0, 0)

    out = pl.pallas_call(
        _critic_kernel,
        out_shape=jax.ShapeDtypeStruct((b_pad, 1), jnp.float32),
        grid_spec=pltpu.PrefetchScalarGridSpec(
            num_scalar_prefetch=0,
            grid=(num_tiles,),
            in_specs=[
                pl.BlockSpec((tb, obs_dim), lambda i: (i, 0)),   # streamed obs tiles
                pl.BlockSpec(w1.shape, const),
                pl.BlockSpec(b1.shape, const),
                pl.BlockSpec(w2.shape, const),
                pl.BlockSpec(b2.shape, const),
                pl.BlockSpec(w3.shape, const),
                pl.BlockSpec(b3.shape, const),
            ],
            out_specs=pl.BlockSpec((tb, 1), lambda i: (i, 0)),
        ),
        compiler_params=pltpu.CompilerParams(
            # Batch tiles are independent -> eligible for megacore sharding on v7x.
            dimension_semantics=("parallel",),
        ),
    )(obs, w1, b1, w2, b2, w3, b3)

    return out[:B, 0]   # plain-JAX glue: drop padding + squeeze(-1)


def init_critic_params(key, obs_dim, hidden_size=64):
    """Deterministic PyTorch-style init: U(-1/sqrt(fan_in), 1/sqrt(fan_in))."""
    def linear(k, fan_in, fan_out):
        kw, kb = jax.random.split(k)
        bound = 1.0 / jnp.sqrt(fan_in)
        w = jax.random.uniform(kw, (fan_in, fan_out), jnp.float32, -bound, bound)
        b = jax.random.uniform(kb, (1, fan_out), jnp.float32, -bound, bound)
        return w, b

    k1, k2, k3 = jax.random.split(key, 3)
    w1, b1 = linear(k1, obs_dim, hidden_size)          # (obs_dim, H), (1, H)
    w2, b2 = linear(k2, hidden_size, hidden_size)      # (H, H), (1, H)
    w3_col, b3 = linear(k3, hidden_size, 1)            # (H, 1), (1, 1)
    w3 = w3_col.T                                      # store as (1, H) row for the kernel
    return (w1, b1, w2, b2, w3, b3)


def _reference_forward(obs, params):
    """Pure-JAX reference for correctness check."""
    w1, b1, w2, b2, w3, b3 = params
    h1 = jnp.maximum(obs @ w1 + b1, 0.0)
    h2 = jnp.maximum(h1 @ w2 + b2, 0.0)
    v = h2 @ w3.T + b3
    return jnp.squeeze(v, axis=-1)


if __name__ == "__main__":
    key = jax.random.PRNGKey(0)
    k_params, k_obs, k_obs2 = jax.random.split(key, 3)

    obs_dim, hidden = 16, 64
    params = init_critic_params(k_params, obs_dim, hidden)

    # Small demo batch (single tile, clamped TILE_B).
    obs = jax.random.normal(k_obs, (8, obs_dim), jnp.float32)
    out = jax.block_until_ready(critic_forward(obs, params))
    ref = _reference_forward(obs, params)
    assert out.shape == (8,), f"bad output shape {out.shape}"
    assert jnp.allclose(out, ref, atol=1e-5, rtol=1e-5), "mismatch vs reference (B=8)"

    # Larger ragged batch: exercises the batch grid, resident weights and padding path.
    obs_big = jax.random.normal(k_obs2, (1000, obs_dim), jnp.float32)
    out_big = jax.block_until_ready(critic_forward(obs_big, params, tile_b=256))
    ref_big = _reference_forward(obs_big, params)
    assert out_big.shape == (1000,), f"bad output shape {out_big.shape}"
    assert jnp.allclose(out_big, ref_big, atol=1e-4, rtol=1e-4), "mismatch vs reference (B=1000)"

    print("KERNEL_OK")
</pallas_src>

<mosaic_0001>
module attributes {stable_mosaic.version = 11 : i64} {
  func.func @_critic_kernel(%arg0: i32, %arg1: memref<8x16xf32, #tpu.memory_space<vmem>>, %arg2: memref<16x64xf32, #tpu.memory_space<vmem>>, %arg3: memref<1x64xf32, #tpu.memory_space<vmem>>, %arg4: memref<64x64xf32, #tpu.memory_space<vmem>>, %arg5: memref<1x64xf32, #tpu.memory_space<vmem>>, %arg6: memref<1x64xf32, #tpu.memory_space<vmem>>, %arg7: memref<1x1xf32, #tpu.memory_space<vmem>>, %arg8: memref<8x1xf32, #tpu.memory_space<vmem>>) attributes {dimension_semantics = [#tpu.dimension_semantics<parallel>], iteration_bounds = array<i64: 1>, scalar_prefetch = 0 : i64, scratch_operands = 0 : i64, tpu.core_type = #tpu.core_type<tc>, window_params = [{transform_indices = @transform_0, window_bounds = array<i64: 8, 16>}, {pipeline_mode = #tpu.pipeline_mode<synchronous>, transform_indices = @transform_1, window_bounds = array<i64: 16, 64>}, {pipeline_mode = #tpu.pipeline_mode<synchronous>, transform_indices = @transform_2, window_bounds = array<i64: 1, 64>}, {pipeline_mode = #tpu.pipeline_mode<synchronous>, transform_indices = @transform_3, window_bounds = array<i64: 64, 64>}, {pipeline_mode = #tpu.pipeline_mode<synchronous>, transform_indices = @transform_4, window_bounds = array<i64: 1, 64>}, {pipeline_mode = #tpu.pipeline_mode<synchronous>, transform_indices = @transform_5, window_bounds = array<i64: 1, 64>}, {pipeline_mode = #tpu.pipeline_mode<synchronous>, transform_indices = @transform_6, window_bounds = array<i64: 1, 1>}, {transform_indices = @transform_7, window_bounds = array<i64: 8, 1>}]} {
    %c0 = arith.constant 0 : index
    %c0_0 = arith.constant 0 : index
    %0 = vector.load %arg1[%c0, %c0_0] : memref<8x16xf32, #tpu.memory_space<vmem>>, vector<8x16xf32>
    %c0_1 = arith.constant 0 : index
    %c0_2 = arith.constant 0 : index
    %1 = vector.load %arg2[%c0_1, %c0_2] : memref<16x64xf32, #tpu.memory_space<vmem>>, vector<16x64xf32>
    %cst = arith.constant dense<0.000000e+00> : vector<8x64xf32>
    %2 = tpu.matmul %0, %1, %cst {dimension_numbers = #tpu.dot_dimension_numbers<[1], [0], [0], [1], [0, 0, 1, 1], [], []>} : vector<8x16xf32>, vector<16x64xf32>, vector<8x64xf32> -> vector<8x64xf32>
    %c0_3 = arith.constant 0 : index
    %c0_4 = arith.constant 0 : index
    %3 = vector.load %arg3[%c0_3, %c0_4] : memref<1x64xf32, #tpu.memory_space<vmem>>, vector<1x64xf32>
    %4 = vector.broadcast %3 : vector<1x64xf32> to vector<8x64xf32>
    %5 = arith.addf %2, %4 : vector<8x64xf32>
    %cst_5 = arith.constant 0.000000e+00 : f32
    %6 = vector.broadcast %cst_5 : f32 to vector<8x64xf32>
    %7 = arith.maximumf %5, %6 : vector<8x64xf32>
    %c0_6 = arith.constant 0 : index
    %c0_7 = arith.constant 0 : index
    %8 = vector.load %arg4[%c0_6, %c0_7] : memref<64x64xf32, #tpu.memory_space<vmem>>, vector<64x64xf32>
    %cst_8 = arith.constant dense<0.000000e+00> : vector<8x64xf32>
    %9 = tpu.matmul %7, %8, %cst_8 {dimension_numbers = #tpu.dot_dimension_numbers<[1], [0], [0], [1], [0, 0, 1, 1], [], []>} : vector<8x64xf32>, vector<64x64xf32>, vector<8x64xf32> -> vector<8x64xf32>
    %c0_9 = arith.constant 0 : index
    %c0_10 = arith.constant 0 : index
    %10 = vector.load %arg5[%c0_9, %c0_10] : memref<1x64xf32, #tpu.memory_space<vmem>>, vector<1x64xf32>
    %11 = vector.broadcast %10 : vector<1x64xf32> to vector<8x64xf32>
    %12 = arith.addf %9, %11 : vector<8x64xf32>
    %cst_11 = arith.constant 0.000000e+00 : f32
    %13 = vector.broadcast %cst_11 : f32 to vector<8x64xf32>
    %14 = arith.maximumf %12, %13 : vector<8x64xf32>
    %c0_12 = arith.constant 0 : index
    %c0_13 = arith.constant 0 : index
    %15 = vector.load %arg6[%c0_12, %c0_13] : memref<1x64xf32, #tpu.memory_space<vmem>>, vector<1x64xf32>
    %16 = vector.broadcast %15 : vector<1x64xf32> to vector<8x64xf32>
    %17 = arith.mulf %14, %16 : vector<8x64xf32>
    %cst_14 = arith.constant dense<0.000000e+00> : vector<8xf32>
    %18 = vector.multi_reduction <add>, %17, %cst_14 [1] : vector<8x64xf32> to vector<8xf32>
    %19 = vector.shape_cast %18 : vector<8xf32> to vector<8x1xf32>
    %c0_15 = arith.constant 0 : index
    %c0_16 = arith.constant 0 : index
    %20 = vector.load %arg7[%c0_15, %c0_16] : memref<1x1xf32, #tpu.memory_space<vmem>>, vector<1x1xf32>
    %21 = vector.broadcast %20 : vector<1x1xf32> to vector<8x1xf32>
    %22 = arith.addf %19, %21 : vector<8x1xf32>
    %c0_17 = arith.constant 0 : index
    %c0_18 = arith.constant 0 : index
    %23 = vector.load %arg8[%c0_17, %c0_18] : memref<8x1xf32, #tpu.memory_space<vmem>>, vector<8x1xf32>
    tpu.vector_store %arg8[%c0_17, %c0_18], %22 {strides = array<i32>} : memref<8x1xf32, #tpu.memory_space<vmem>>, vector<8x1xf32>,
    return
  }
  func.func @transform_0(%arg0: i32) -> (i32, i32) {
    %c0_i32 = arith.constant 0 : i32
    %c0_i32_0 = arith.constant 0 : i32
    return %arg0, %c0_i32 : i32, i32
  }
  func.func @transform_1(%arg0: i32) -> (i32, i32) {
    %c0_i32 = arith.constant 0 : i32
    %c0_i32_0 = arith.constant 0 : i32
    %c0_i32_1 = arith.constant 0 : i32
    return %c0_i32, %c0_i32_0 : i32, i32
  }
  func.func @transform_2(%arg0: i32) -> (i32, i32) {
    %c0_i32 = arith.constant 0 : i32
    %c0_i32_0 = arith.constant 0 : i32
    %c0_i32_1 = arith.constant 0 : i32
    return %c0_i32, %c0_i32_0 : i32, i32
  }
  func.func @transform_3(%arg0: i32) -> (i32, i32) {
    %c0_i32 = arith.constant 0 : i32
    %c0_i32_0 = arith.constant 0 : i32
    %c0_i32_1 = arith.constant 0 : i32
    return %c0_i32, %c0_i32_0 : i32, i32
  }
  func.func @transform_4(%arg0: i32) -> (i32, i32) {
    %c0_i32 = arith.constant 0 : i32
    %c0_i32_0 = arith.constant 0 : i32
    %c0_i32_1 = arith.constant 0 : i32
    return %c0_i32, %c0_i32_0 : i32, i32
  }
  func.func @transform_5(%arg0: i32) -> (i32, i32) {
    %c0_i32 = arith.constant 0 : i32
    %c0_i32_0 = arith.constant 0 : i32
    %c0_i32_1 = arith.constant 0 : i32
    return %c0_i32, %c0_i32_0 : i32, i32
  }
  func.func @transform_6(%arg0: i32) -> (i32, i32) {
    %c0_i32 = arith.constant 0 : i32
    %c0_i32_0 = arith.constant 0 : i32
    %c0_i32_1 = arith.constant 0 : i32
    return %c0_i32, %c0_i32_0 : i32, i32
  }
  func.func @transform_7(%arg0: i32) -> (i32, i32) {
    %c0_i32 = arith.constant 0 : i32
    %c0_i32_0 = arith.constant 0 : i32
    return %arg0, %c0_i32 : i32, i32
  }
}

</mosaic_0001>

<llo_original>
// kernel: tpu_custom_call.1
$region0: #{tpu_custom_call.1}
  #allocation0 [shape = 'u32[]', space=smem, size = 0x4, offset = 0x4, fixed_abs, tag = 'smem constant byte address 0x4 - core index']
  #allocation1 [shape = 'u32[144,128]{1,0:T(1,128)}', space=vmem, size = 0x12000, scoped, tag = 'internal scratch']
  #allocation2 [shape = 'f32[1,1]{1,0:T(1,128)S(1)}', space=vmem, size = 0x200, scoped, tag = 'scoped memory for tpu_custom_call.1']
  %s0 = inlined_call_operand.hbm [shape: f32[8,16], index: 0, kind: input, shape index: {}]
  %s1 = inlined_call_operand.hbm [shape: f32[16,64], index: 1, kind: input, shape index: {}]
  %s2 = inlined_call_operand.vmem [shape: f32[1,64], index: 2, kind: input, shape index: {}]
  %s3 = inlined_call_operand.hbm [shape: f32[64,64], index: 3, kind: input, shape index: {}]
  %s4 = inlined_call_operand.vmem [shape: f32[1,64], index: 4, kind: input, shape index: {}]
  %s5 = inlined_call_operand.vmem [shape: f32[1,64], index: 5, kind: input, shape index: {}]
  %s6 = inlined_call_operand.<no memory space> [shape: f32[1,1], index: 6, kind: input, shape index: {}]
  %s7 = inlined_call_operand.vmem [shape: f32[8,1], index: 7, kind: output, shape index: {}]
  %s8 = sld [smem:[#allocation0]]
  $region50: #{tpu_custom_call.1} parent=0
    _
  %s10 = ssub.s32 1, %s8
  %s11 = scalar_select 0, %s10, %s8
  %v12 = vstv %s6
  %13 = vst [vmem:[#allocation2] sm:$0x1] %v12
  $region1: #{tpu_custom_call.1} parent=0
    #allocation3 [shape = 'u8[4096]{0}', space=vmem, size = 0x1000, scoped, tag = 'input window, operand 0, single buffered']
    #allocation4 [shape = 's32[1]{0}', space=sflag, size = 0x4, scoped, tag = 'scoped memory for tpu_custom_call.1']
    #allocation5 [shape = 'u8[8192]{0}', space=vmem, size = 0x2000, scoped, tag = 'input window, operand 1, single buffered']
    #allocation6 [shape = 's32[1]{0}', space=sflag, size = 0x4, scoped, tag = 'scoped memory for tpu_custom_call.1']
    #allocation7 [shape = 'u8[32768]{0}', space=vmem, size = 0x8000, scoped, tag = 'input window, operand 3, single buffered']
    %14 = vsyncpa [#allocation4], 0
    %15 = vsyncpa [#allocation6], 0
    // Predicated region
    $region2: #{tpu_custom_call.1} parent=1 // pred_check
      _
    $region3: #{tpu_custom_call.1} parent=1 // pred_check_branch
      %17 = sbr.rel (0) target = $region5
    $region4: #{tpu_custom_call.1} parent=1 // pred_region
      %s19 = ssub.s32 128, 128
      %20 = vsyncadd [#allocation4], %s19
      %s22 = sshll.u32 [#allocation3], 4
      %s23 = int_to_ptr.vmem [resolvable:$true] %s22
      %25 = dma.hbm_to_vmem [thread:$0]  %s0, 128, %s23, [#allocation4]
    $region5: #{tpu_custom_call.1} parent=1 // pred_fallthru
      _
    // Predicated region
    $region6: #{tpu_custom_call.1} parent=1 // pred_check
      _
    $region7: #{tpu_custom_call.1} parent=1 // pred_check_branch
      %27 = sbr.rel (0) target = $region9
    $region8: #{tpu_custom_call.1} parent=1 // pred_region
      %s29 = ssub.s32 256, 256
      %30 = vsyncadd [#allocation6], %s29
      %s31 = sshll.u32 [#allocation5], 4
      %s32 = int_to_ptr.vmem [resolvable:$true] %s31
      %37 = dma.hbm_to_vmem [thread:$0]  %s1, 256, %s32, [#allocation6], 128, 128, 8
    $region9: #{tpu_custom_call.1} parent=1 // pred_fallthru
      _
    // Predicated region
    $region10: #{tpu_custom_call.1} parent=1 // pred_check
      _
    $region11: #{tpu_custom_call.1} parent=1 // pred_check_branch
      %39 = sbr.rel (0) target = $region13
    $region12: #{tpu_custom_call.1} parent=1 // pred_region
      _
    $region13: #{tpu_custom_call.1} parent=1 // pred_fallthru
      _
    // Predicated region
    $region14: #{tpu_custom_call.1} parent=1 // pred_check
      _
    $region15: #{tpu_custom_call.1} parent=1 // pred_check_branch
      %41 = sbr.rel (0) target = $region17
    $region16: #{tpu_custom_call.1} parent=1 // pred_region
      %s43 = ssub.s32 1024, 1024
      %44 = vsyncadd [#allocation6], %s43
      %s45 = sshll.u32 [#allocation7], 4
      %s46 = int_to_ptr.vmem [resolvable:$true] %s45
      %51 = dma.hbm_to_vmem [thread:$0]  %s3, 1024, %s46, [#allocation6], 128, 128, 8
    $region17: #{tpu_custom_call.1} parent=1 // pred_fallthru
      _
    // Predicated region
    $region18: #{tpu_custom_call.1} parent=1 // pred_check
      _
    $region19: #{tpu_custom_call.1} parent=1 // pred_check_branch
      %53 = sbr.rel (0) target = $region21
    $region20: #{tpu_custom_call.1} parent=1 // pred_region
      _
    $region21: #{tpu_custom_call.1} parent=1 // pred_fallthru
      _
    // Predicated region
    $region22: #{tpu_custom_call.1} parent=1 // pred_check
      _
    $region23: #{tpu_custom_call.1} parent=1 // pred_check_branch
      %55 = sbr.rel (0) target = $region25
    $region24: #{tpu_custom_call.1} parent=1 // pred_region
      _
    $region25: #{tpu_custom_call.1} parent=1 // pred_fallthru
      _
    // Predicated region
    $region26: #{tpu_custom_call.1} parent=1 // pred_check
      _
    $region27: #{tpu_custom_call.1} parent=1 // pred_check_branch
      %57 = sbr.rel (0) target = $region29
    $region28: #{tpu_custom_call.1} parent=1 // pred_region
      _
    $region29: #{tpu_custom_call.1} parent=1 // pred_fallthru
      _
    // Predicated region
    $region30: #{tpu_custom_call.1} parent=1 // pred_check
      _
    $region31: #{tpu_custom_call.1} parent=1 // pred_check_branch
      %59 = sbr.rel (0) target = $region33
    $region32: #{tpu_custom_call.1} parent=1 // pred_region
      %60 = dma.done [#allocation4], 128
    $region33: #{tpu_custom_call.1} parent=1 // pred_fallthru
      _
    // Predicated region
    $region34: #{tpu_custom_call.1} parent=1 // pred_check
      _
    $region35: #{tpu_custom_call.1} parent=1 // pred_check_branch
      %62 = sbr.rel (0) target = $region37
    $region36: #{tpu_custom_call.1} parent=1 // pred_region
      %63 = dma.done [#allocation6], 256
    $region37: #{tpu_custom_call.1} parent=1 // pred_fallthru
      _
    // Predicated region
    $region38: #{tpu_custom_call.1} parent=1 // pred_check
      _
    $region39: #{tpu_custom_call.1} parent=1 // pred_check_branch
      %65 = sbr.rel (0) target = $region41
    $region40: #{tpu_custom_call.1} parent=1 // pred_region
      %66 = dma.done [#allocation6], 1024
    $region41: #{tpu_custom_call.1} parent=1 // pred_fallthru
      _
    %v67 = vld [vmem:[#allocation3] sm:$0xff]
    %v68 = vld [vmem:[#allocation5] sm:$0xff]
    %v69 = vld [vmem:[#allocation5 + $0x8] sm:$0xff]
    %v70 = vld [vmem:[%s2] sm:$0x1]
    %v72 = vlaneseq
    %v73 = vshrl.u32 %v72, 7
    %v74 = vsub.s32 0, %v73
    %v75 = vrot.slane %v70, %v74
    %vm77 = vcmask 130048
    %v79 = vsel %vm77, %v67, 0
    %81 = vmatprep.subr.mxu0 0.0
    %82 = vmatpush1.msra.mxu0 %v68
    %83 = vmatprep.subr.mxu0 0.0
    %84 = vmatpush1.msra.mxu0 %v69
    %85 = vmatprep.subr.mxu0 0.0
    %86 = vmatpush1.msra.mxu0 0.0
    %87 = vmatprep.subr.mxu0 0.0
    %88 = vmatpush1.msra.mxu0 0.0
    %89 = vmatprep.subr.mxu0 0.0
    %90 = vmatpush1.msra.mxu0 0.0
    %91 = vmatprep.subr.mxu0 0.0
    %92 = vmatpush1.msra.mxu0 0.0
    %93 = vmatprep.subr.mxu0 0.0
    %94 = vmatpush1.msra.mxu0 0.0
    %95 = vmatprep.subr.mxu0 0.0
    %96 = vmatpush1.msra.mxu0 0.0
    %97 = vmatprep.subr.mxu0 0.0
    %98 = vmatpush1.msra.mxu0 0.0
    %99 = vmatprep.subr.mxu0 0.0
    %100 = vmatpush1.msra.mxu0 0.0
    %101 = vmatprep.subr.mxu0 0.0
    %102 = vmatpush1.msra.mxu0 0.0
    %103 = vmatprep.subr.mxu0 0.0
    %104 = vmatpush1.msra.mxu0 0.0
    %105 = vmatprep.subr.mxu0 0.0
    %106 = vmatpush1.msra.mxu0 0.0
    %107 = vmatprep.subr.mxu0 0.0
    %108 = vmatpush1.msra.mxu0 0.0
    %109 = vmatprep.subr.mxu0 0.0
    %110 = vmatpush1.msra.mxu0 0.0
    %111 = vmatprep.subr.mxu0 0.0
    %112 = vmatpush1.msra.mxu0 0.0
    %113 = vmatprep.subr.mxu0 0.0
    %114 = vmatpush1.msra.mxu0 0.0
    %115 = vmatprep.subr.mxu0 0.0
    %116 = vmatpush1.msra.mxu0 0.0
    %117 = vmatprep.subr.mxu0 0.0
    %118 = vmatpush1.msra.mxu0 0.0
    %119 = vmatprep.subr.mxu0 0.0
    %120 = vmatpush1.msra.mxu0 0.0
    %121 = vmatprep.subr.mxu0 0.0
    %122 = vmatpush1.msra.mxu0 0.0
    %123 = vmatprep.subr.mxu0 0.0
    %124 = vmatpush1.msra.mxu0 0.0
    %125 = vmatprep.subr.mxu0 0.0
    %126 = vmatpush1.msra.mxu0 0.0
    %127 = vmatprep.subr.mxu0 0.0
    %128 = vmatpush1.msra.mxu0 0.0
    %129 = vmatprep.subr.mxu0 0.0
    %130 = vmatpush1.msra.mxu0 0.0
    %131 = vmatprep.subr.mxu0 0.0
    %132 = vmatpush1.msra.mxu0 0.0
    %133 = vmatprep.subr.mxu0 0.0
    %134 = vmatpush1.msra.mxu0 0.0
    %135 = vmatprep.subr.mxu0 0.0
    %136 = vmatpush1.msra.mxu0 0.0
    %137 = vmatprep.subr.mxu0 0.0
    %138 = vmatpush1.msra.mxu0 0.0
    %139 = vmatprep.subr.mxu0 0.0
    %140 = vmatpush1.msra.mxu0 0.0
    %141 = vmatprep.subr.mxu0 0.0
    %142 = vmatpush1.msra.mxu0 0.0
    %143 = vmatprep.subr.mxu0 0.0
    %144 = vmatpush1.msra.mxu0 0.0
    %145 = vmatprep.mubr.f32.mxu0 0.0
    %146 = vmatmul.mubr.f32.gmra.mrb[0].mxu0 %v79
    %v147 = vpop.f32.mrb[0].mxu0
    %v148 = vadd.f32 %v75, %v147
    %v149 = vpop.f32.mrb[0].mxu0
    %150 = vdwg.mxu0
    %v151 = vmax.f32 %v148, 0.0
    %v152 = vld [vmem:[#allocation7] sm:$0xff]
    %v153 = vld [vmem:[#allocation7 + $0x8] sm:$0xff]
    %v154 = vld [vmem:[#allocation7 + $0x10] sm:$0xff]
    %v155 = vld [vmem:[#allocation7 + $0x18] sm:$0xff]
    %v156 = vld [vmem:[#allocation7 + $0x20] sm:$0xff]
    %v157 = vld [vmem:[#allocation7 + $0x28] sm:$0xff]
    %v158 = vld [vmem:[#allocation7 + $0x30] sm:$0xff]
    %v159 = vld [vmem:[#allocation7 + $0x38] sm:$0xff]
    %v160 = vld [vmem:[%s4] sm:$0x1]
    %v162 = vlaneseq
    %v163 = vshrl.u32 %v162, 7
    %v164 = vsub.s32 0, %v163
    %v165 = vrot.slane %v160, %v164
    %vm167 = vcmask 523264
    %v169 = vsel %vm167, %v151, 0
    %171 = vmatprep.subr.mxu0 0.0
    %172 = vmatpush1.msra.mxu0 %v152
    %173 = vmatprep.subr.mxu0 0.0
    %174 = vmatpush1.msra.mxu0 %v153
    %175 = vmatprep.subr.mxu0 0.0
    %176 = vmatpush1.msra.mxu0 %v154
    %177 = vmatprep.subr.mxu0 0.0
    %178 = vmatpush1.msra.mxu0 %v155
    %179 = vmatprep.subr.mxu0 0.0
    %180 = vmatpush1.msra.mxu0 %v156
    %181 = vmatprep.subr.mxu0 0.0
    %182 = vmatpush1.msra.mxu0 %v157
    %183 = vmatprep.subr.mxu0 0.0
    %184 = vmatpush1.msra.mxu0 %v158
    %185 = vmatprep.subr.mxu0 0.0
    %186 = vmatpush1.msra.mxu0 %v159
    %187 = vmatprep.subr.mxu0 0.0
    %188 = vmatpush1.msra.mxu0 0.0
    %189 = vmatprep.subr.mxu0 0.0
    %190 = vmatpush1.msra.mxu0 0.0
    %191 = vmatprep.subr.mxu0 0.0
    %192 = vmatpush1.msra.mxu0 0.0
    %193 = vmatprep.subr.mxu0 0.0
    %194 = vmatpush1.msra.mxu0 0.0
    %195 = vmatprep.subr.mxu0 0.0
    %196 = vmatpush1.msra.mxu0 0.0
    %197 = vmatprep.subr.mxu0 0.0
    %198 = vmatpush1.msra.mxu0 0.0
    %199 = vmatprep.subr.mxu0 0.0
    %200 = vmatpush1.msra.mxu0 0.0
    %201 = vmatprep.subr.mxu0 0.0
    %202 = vmatpush1.msra.mxu0 0.0
    %203 = vmatprep.subr.mxu0 0.0
    %204 = vmatpush1.msra.mxu0 0.0
    %205 = vmatprep.subr.mxu0 0.0
    %206 = vmatpush1.msra.mxu0 0.0
    %207 = vmatprep.subr.mxu0 0.0
    %208 = vmatpush1.msra.mxu0 0.0
    %209 = vmatprep.subr.mxu0 0.0
    %210 = vmatpush1.msra.mxu0 0.0
    %211 = vmatprep.subr.mxu0 0.0
    %212 = vmatpush1.msra.mxu0 0.0
    %213 = vmatprep.subr.mxu0 0.0
    %214 = vmatpush1.msra.mxu0 0.0
    %215 = vmatprep.subr.mxu0 0.0
    %216 = vmatpush1.msra.mxu0 0.0
    %217 = vmatprep.subr.mxu0 0.0
    %218 = vmatpush1.msra.mxu0 0.0
    %219 = vmatprep.subr.mxu0 0.0
    %220 = vmatpush1.msra.mxu0 0.0
    %221 = vmatprep.subr.mxu0 0.0
    %222 = vmatpush1.msra.mxu0 0.0
    %223 = vmatprep.subr.mxu0 0.0
    %224 = vmatpush1.msra.mxu0 0.0
    %225 = vmatprep.subr.mxu0 0.0
    %226 = vmatpush1.msra.mxu0 0.0
    %227 = vmatprep.subr.mxu0 0.0
    %228 = vmatpush1.msra.mxu0 0.0
    %229 = vmatprep.subr.mxu0 0.0
    %230 = vmatpush1.msra.mxu0 0.0
    %231 = vmatprep.subr.mxu0 0.0
    %232 = vmatpush1.msra.mxu0 0.0
    %233 = vmatprep.subr.mxu0 0.0
    %234 = vmatpush1.msra.mxu0 0.0
    %235 = vmatprep.mubr.f32.mxu0 0.0
    %236 = vmatmul.mubr.f32.gmra.mrb[0].mxu0 %v169
    %v237 = vpop.f32.mrb[0].mxu0
    %v238 = vadd.f32 %v165, %v237
    %v239 = vpop.f32.mrb[0].mxu0
    %240 = vdwg.mxu0
    %v241 = vmax.f32 %v238, 0.0
    %v242 = vld [vmem:[%s5] sm:$0x1]
    %v244 = vlaneseq
    %v245 = vshrl.u32 %v244, 7
    %v246 = vsub.s32 0, %v245
    %v247 = vrot.slane %v242, %v246
    %v249 = vmul.f32 %v241, %v247
    %v250 = vsel %vm167, %v249, 0.0
    %251 = vadd.xlane.f32.xlu0 %v250
    %v252 = vpop.xlane.xlu0 %251
    %v253 = vld [vmem:[#allocation2] sm:$0x1]
    %v255 = vlaneseq
    %v256 = vshrl.u32 %v255, 7
    %v257 = vsub.s32 0, %v256
    %v258 = vrot.slane %v253, %v257
    %v260 = vadd.f32 %v252, %v258
    %vm261 = vcmask 7168
    %262 = vst.msk [vmem:[%s7] sm:$0xff] %vm261, %v260
    // Predicated region
    $region42: #{tpu_custom_call.1} parent=1 // pred_check
      _
    $region43: #{tpu_custom_call.1} parent=1 // pred_check_branch
      %264 = sbr.rel (0) target = $region45
    $region44: #{tpu_custom_call.1} parent=1 // pred_region
      _
    $region45: #{tpu_custom_call.1} parent=1 // pred_fallthru
      _
    // Predicated region
    $region46: #{tpu_custom_call.1} parent=1 // pred_check
      _
    $region47: #{tpu_custom_call.1} parent=1 // pred_check_branch
      %266 = sbr.rel (0) target = $region49
    $region48: #{tpu_custom_call.1} parent=1 // pred_region
      _
    $region49: #{tpu_custom_call.1} parent=1 // pred_fallthru
      _
    %267 = vsyncpa [#allocation4], 1
    %268 = vsyncpa [#allocation6], 1

</llo_original>
